<compile_context>
chip_gen: v6e
topology: v6e:2x2x1
jax: 0.10.0
libtpu: 0.0.40
codegen_flags: <defaults>
</compile_context>

<pallas_src>
import jax
import jax.numpy as jnp
from jax.experimental import pallas as pl
from jax.experimental.pallas import tpu as pltpu

SEQ = 10
D_IN = 101
D_FLAT = SEQ * D_IN          # 1010
OUT_PAD = 128                # pad fc3's 2 output features to a full lane register


def neuralnet_kernel(x_ref, w_ref, b_ref, out_ref):
    # Entire folded network: one (TB, 1010) @ (1010, 128) matmul + bias.
    out_ref[...] = (
        jnp.dot(x_ref[...], w_ref[...], preferred_element_type=jnp.float32)
        + b_ref[...]
    )


def prepare_params(w1, b1, w2, b2, w3, b3):
    """One-time offline fold of the purely-affine network into (W_big, b_all).

    PyTorch Linear layouts: w1 (1024,101), w2 (1024,2048), w3 (2,1024),
    biases (out,).
    """
    w1t = jnp.asarray(w1, jnp.float32).T            # (101, 1024)
    w2t = jnp.asarray(w2, jnp.float32).T            # (2048, 1024)
    w2a, w2b = w2t[:1024, :], w2t[1024:, :]         # halves for the two sums
    w3t = jnp.asarray(w3, jnp.float32).T            # (1024, 2)
    b1r = jnp.asarray(b1, jnp.float32).reshape(1, -1)
    b2r = jnp.asarray(b2, jnp.float32).reshape(1, -1)
    b3r = jnp.asarray(b3, jnp.float32).reshape(1, -1)

    # Full fold (valid because forward() has no nonlinearity anywhere).
    w13a = w1t @ (w2a @ w3t)                        # (101, 2)
    w13b = w1t @ (w2b @ w3t)                        # (101, 2)
    b_all = (5.0 * b1r @ (w2a + w2b) + b2r) @ w3t + b3r    # (1, 2)

    # Block-diagonal weight over the flattened (seq, feature) axis, so the
    # seq-sum is absorbed into the matmul as well.
    w_big = jnp.zeros((D_FLAT, OUT_PAD), jnp.float32)
    for s in range(SEQ):
        blk = w13a if s < 5 else w13b
        w_big = w_big.at[s * D_IN:(s + 1) * D_IN, :2].set(blk)
    b_pad = jnp.zeros((1, OUT_PAD), jnp.float32).at[:, :2].set(b_all)
    return w_big, b_pad


def _round_up(n, m):
    return ((n + m - 1) // m) * m


def _choose_tile(bp, tb):
    """Largest multiple-of-8 divisor of bp that is <= tb; prefer >= 2 grid steps."""
    tb = max(8, (tb // 8) * 8)
    best, d = 8, 8
    limit = min(tb, bp)
    while d <= limit:
        if bp % d == 0:
            best = d
        d += 8
    # v7x has 2 TensorCores: split the batch-parallel grid across both when possible.
    if best == bp and bp >= 16 and (bp // 2) % 8 == 0 and (bp // 2) <= tb:
        best = bp // 2
    return best


def neuralnet_forward(x, params, *, tb=512):
    """x: (B, 10, 101) f32. params: output of prepare_params(). Returns (B, 2)."""
    w_big, b_pad = params
    B = x.shape[0]
    x2 = jnp.asarray(x, jnp.float32).reshape(B, D_FLAT)   # contiguous -> free
    Bp = _round_up(B, 8)
    if Bp != B:
        x2 = jnp.pad(x2, ((0, Bp - B), (0, 0)))           # pads at most 7 rows
    TB = _choose_tile(Bp, tb)

    const = lambda i: (0, 0)   # weights/bias stay VMEM-resident (DMA'd once)
    out = pl.pallas_call(
        neuralnet_kernel,
        out_shape=jax.ShapeDtypeStruct((Bp, OUT_PAD), jnp.float32),
        grid=(Bp // TB,),
        in_specs=[
            pl.BlockSpec((TB, D_FLAT), lambda i: (i, 0)),   # x tile (pipelined)
            pl.BlockSpec((D_FLAT, OUT_PAD), const),          # folded weight (~0.5 MB)
            pl.BlockSpec((1, OUT_PAD), const),               # folded bias
        ],
        out_specs=pl.BlockSpec((TB, OUT_PAD), lambda i: (i, 0)),
        compiler_params=pltpu.CompilerParams(
            dimension_semantics=("parallel",),
        ),
    )(x2, w_big, b_pad)
    return out[:B, :2]


def _reference(x, w1, b1, w2, b2, w3, b3):
    h = jnp.einsum("bsd,kd->bsk", x, w1) + b1
    c = jnp.concatenate(
        [jnp.sum(h[:, 0:5, :], axis=1), jnp.sum(h[:, 5:10, :], axis=1)], axis=1)
    z = c @ w2.T + b2
    return z @ w3.T + b3


if __name__ == "__main__":
    key = jax.random.PRNGKey(0)
    k_x, k_w1, k_b1, k_w2, k_b2, k_w3, k_b3, k_x2 = jax.random.split(key, 8)

    B = 2
    x = jax.random.normal(k_x, (B, SEQ, D_IN), dtype=jnp.float32)

    # Deterministic parameter init (PyTorch Linear shapes: (out, in) + (out,)).
    w1 = jax.random.normal(k_w1, (1024, 101), dtype=jnp.float32) * 0.05
    b1 = jax.random.normal(k_b1, (1024,), dtype=jnp.float32) * 0.05
    w2 = jax.random.normal(k_w2, (1024, 2048), dtype=jnp.float32) * 0.02
    b2 = jax.random.normal(k_b2, (1024,), dtype=jnp.float32) * 0.02
    w3 = jax.random.normal(k_w3, (2, 1024), dtype=jnp.float32) * 0.02
    b3 = jax.random.normal(k_b3, (2,), dtype=jnp.float32) * 0.02

    params = prepare_params(w1, b1, w2, b2, w3, b3)   # one-time, off hot path

    # Main check: small batch (grid=1 path).
    out = jax.block_until_ready(neuralnet_forward(x, params))
    ref = _reference(x, w1, b1, w2, b2, w3, b3)
    assert out.shape == (B, 2), out.shape
    assert jnp.allclose(out, ref, atol=1e-3, rtol=1e-3), (out, ref)

    # Extra check: batch not a multiple of the tile -> padded, multi-step grid.
    B2 = 37
    x_big = jax.random.normal(k_x2, (B2, SEQ, D_IN), dtype=jnp.float32)
    out_big = jax.block_until_ready(neuralnet_forward(x_big, params, tb=16))
    ref_big = _reference(x_big, w1, b1, w2, b2, w3, b3)
    assert out_big.shape == (B2, 2), out_big.shape
    assert jnp.allclose(out_big, ref_big, atol=1e-3, rtol=1e-3)

    print("KERNEL_OK")
</pallas_src>

<mosaic_0001>
module attributes {stable_mosaic.version = 11 : i64} {
  func.func @neuralnet_kernel(%arg0: i32, %arg1: memref<8x1010xf32, #tpu.memory_space<vmem>>, %arg2: memref<1010x128xf32, #tpu.memory_space<vmem>>, %arg3: memref<1x128xf32, #tpu.memory_space<vmem>>, %arg4: memref<8x128xf32, #tpu.memory_space<vmem>>) attributes {dimension_semantics = [#tpu.dimension_semantics<parallel>], iteration_bounds = array<i64: 1>, scalar_prefetch = 0 : i64, scratch_operands = 0 : i64, tpu.core_type = #tpu.core_type<tc>, window_params = [{transform_indices = @transform_0, window_bounds = array<i64: 8, 1010>}, {pipeline_mode = #tpu.pipeline_mode<synchronous>, transform_indices = @transform_1, window_bounds = array<i64: 1010, 128>}, {pipeline_mode = #tpu.pipeline_mode<synchronous>, transform_indices = @transform_2, window_bounds = array<i64: 1, 128>}, {transform_indices = @transform_3, window_bounds = array<i64: 8, 128>}]} {
    %c0 = arith.constant 0 : index
    %c0_0 = arith.constant 0 : index
    %0 = vector.load %arg1[%c0, %c0_0] : memref<8x1010xf32, #tpu.memory_space<vmem>>, vector<8x1010xf32>
    %c0_1 = arith.constant 0 : index
    %c0_2 = arith.constant 0 : index
    %1 = vector.load %arg2[%c0_1, %c0_2] : memref<1010x128xf32, #tpu.memory_space<vmem>>, vector<1010x128xf32>
    %cst = arith.constant dense<0.000000e+00> : vector<8x128xf32>
    %2 = tpu.matmul %0, %1, %cst {dimension_numbers = #tpu.dot_dimension_numbers<[1], [0], [0], [1], [0, 0, 1, 1], [], []>} : vector<8x1010xf32>, vector<1010x128xf32>, vector<8x128xf32> -> vector<8x128xf32>
    %c0_3 = arith.constant 0 : index
    %c0_4 = arith.constant 0 : index
    %3 = vector.load %arg3[%c0_3, %c0_4] : memref<1x128xf32, #tpu.memory_space<vmem>>, vector<1x128xf32>
    %4 = vector.broadcast %3 : vector<1x128xf32> to vector<8x128xf32>
    %5 = arith.addf %2, %4 : vector<8x128xf32>
    %c0_5 = arith.constant 0 : index
    %c0_6 = arith.constant 0 : index
    %6 = vector.load %arg4[%c0_5, %c0_6] : memref<8x128xf32, #tpu.memory_space<vmem>>, vector<8x128xf32>
    tpu.vector_store %arg4[%c0_5, %c0_6], %5 {strides = array<i32>} : memref<8x128xf32, #tpu.memory_space<vmem>>, vector<8x128xf32>,
    return
  }
  func.func @transform_0(%arg0: i32) -> (i32, i32) {
    %c0_i32 = arith.constant 0 : i32
    %c0_i32_0 = arith.constant 0 : i32
    return %arg0, %c0_i32 : i32, i32
  }
  func.func @transform_1(%arg0: i32) -> (i32, i32) {
    %c0_i32 = arith.constant 0 : i32
    %c0_i32_0 = arith.constant 0 : i32
    %c0_i32_1 = arith.constant 0 : i32
    return %c0_i32, %c0_i32_0 : i32, i32
  }
  func.func @transform_2(%arg0: i32) -> (i32, i32) {
    %c0_i32 = arith.constant 0 : i32
    %c0_i32_0 = arith.constant 0 : i32
    %c0_i32_1 = arith.constant 0 : i32
    return %c0_i32, %c0_i32_0 : i32, i32
  }
  func.func @transform_3(%arg0: i32) -> (i32, i32) {
    %c0_i32 = arith.constant 0 : i32
    %c0_i32_0 = arith.constant 0 : i32
    return %arg0, %c0_i32 : i32, i32
  }
}

</mosaic_0001>

<llo_original>
// kernel: tpu_custom_call.1
$region0: #{tpu_custom_call.1}
  #allocation0 [shape = 'u32[]', space=smem, size = 0x4, offset = 0x4, fixed_abs, tag = 'smem constant byte address 0x4 - core index']
  #allocation1 [shape = 'u32[144,128]{1,0:T(1,128)}', space=vmem, size = 0x12000, scoped, tag = 'internal scratch']
  %s0 = inlined_call_operand.hbm [shape: f32[8,1010], index: 0, kind: input, shape index: {}]
  %s1 = inlined_call_operand.hbm [shape: f32[1010,128], index: 1, kind: input, shape index: {}]
  %s2 = inlined_call_operand.vmem [shape: f32[1,128], index: 2, kind: input, shape index: {}]
  %s3 = inlined_call_operand.hbm [shape: f32[8,128], index: 3, kind: output, shape index: {}]
  %s4 = sld [smem:[#allocation0]]
  $region30: #{tpu_custom_call.1} parent=0
    _
  %s6 = ssub.s32 1, %s4
  %s7 = scalar_select 0, %s6, %s4
  $region1: #{tpu_custom_call.1} parent=0
    #allocation2 [shape = 'u8[32768]{0}', space=vmem, size = 0x8000, scoped, tag = 'input window, operand 0, single buffered']
    #allocation3 [shape = 's32[1]{0}', space=sflag, size = 0x4, scoped, tag = 'scoped memory for tpu_custom_call.1']
    #allocation4 [shape = 's32[1]{0}', space=sflag, size = 0x4, scoped, tag = 'scoped memory for tpu_custom_call.1']
    #allocation5 [shape = 'u8[520192]{0}', space=vmem, size = 0x7f000, scoped, tag = 'input window, operand 1, single buffered']
    #allocation6 [shape = 's32[1]{0}', space=sflag, size = 0x4, scoped, tag = 'scoped memory for tpu_custom_call.1']
    #allocation7 [shape = 'u8[4096]{0}', space=vmem, size = 0x1000, scoped, tag = 'output window, operand 0, single buffered']
    %8 = vsyncpa [#allocation3], 0
    %9 = vsyncpa [#allocation6], 0
    %10 = vsyncpa [#allocation4], 0
    // Predicated region
    $region2: #{tpu_custom_call.1} parent=1 // pred_check
      _
    $region3: #{tpu_custom_call.1} parent=1 // pred_check_branch
      %12 = sbr.rel (0) target = $region5
    $region4: #{tpu_custom_call.1} parent=1 // pred_region
      %s14 = ssub.s32 1024, 1024
      %15 = vsyncadd [#allocation3], %s14
      %s17 = sshll.u32 [#allocation2], 4
      %s18 = int_to_ptr.vmem [resolvable:$true] %s17
      %20 = dma.hbm_to_vmem [thread:$0]  %s0, 1024, %s18, [#allocation3]
    $region5: #{tpu_custom_call.1} parent=1 // pred_fallthru
      _
    // Predicated region
    $region6: #{tpu_custom_call.1} parent=1 // pred_check
      _
    $region7: #{tpu_custom_call.1} parent=1 // pred_check_branch
      %22 = sbr.rel (0) target = $region9
    $region8: #{tpu_custom_call.1} parent=1 // pred_region
      %s24 = ssub.s32 16256, 16256
      %25 = vsyncadd [#allocation6], %s24
      %s26 = sshll.u32 [#allocation5], 4
      %s27 = int_to_ptr.vmem [resolvable:$true] %s26
      %32 = dma.hbm_to_vmem [thread:$0]  %s1, 16256, %s27, [#allocation6], 128, 128, 8
    $region9: #{tpu_custom_call.1} parent=1 // pred_fallthru
      _
    // Predicated region
    $region10: #{tpu_custom_call.1} parent=1 // pred_check
      _
    $region11: #{tpu_custom_call.1} parent=1 // pred_check_branch
      %34 = sbr.rel (0) target = $region13
    $region12: #{tpu_custom_call.1} parent=1 // pred_region
      _
    $region13: #{tpu_custom_call.1} parent=1 // pred_fallthru
      _
    // Predicated region
    $region14: #{tpu_custom_call.1} parent=1 // pred_check
      _
    $region15: #{tpu_custom_call.1} parent=1 // pred_check_branch
      %36 = sbr.rel (0) target = $region17
    $region16: #{tpu_custom_call.1} parent=1 // pred_region
      %37 = dma.done [#allocation3], 1024
    $region17: #{tpu_custom_call.1} parent=1 // pred_fallthru
      _
    // Predicated region
    $region18: #{tpu_custom_call.1} parent=1 // pred_check
      _
    $region19: #{tpu_custom_call.1} parent=1 // pred_check_branch
      %39 = sbr.rel (0) target = $region21
    $region20: #{tpu_custom_call.1} parent=1 // pred_region
      %40 = dma.done [#allocation6], 16256
    $region21: #{tpu_custom_call.1} parent=1 // pred_fallthru
      _
    %v41 = vld [vmem:[#allocation2] sm:$0xff]
    %v42 = vld [vmem:[#allocation2 + $0x8] sm:$0xff]
    %v43 = vld [vmem:[#allocation2 + $0x10] sm:$0xff]
    %v44 = vld [vmem:[#allocation2 + $0x18] sm:$0xff]
    %v45 = vld [vmem:[#allocation2 + $0x20] sm:$0xff]
    %v46 = vld [vmem:[#allocation2 + $0x28] sm:$0xff]
    %v47 = vld [vmem:[#allocation2 + $0x30] sm:$0xff]
    %v48 = vld [vmem:[#allocation2 + $0x38] sm:$0xff]
    %v49 = vld [vmem:[#allocation5] sm:$0xff]
    %v50 = vld [vmem:[#allocation5 + $0x8] sm:$0xff]
    %v51 = vld [vmem:[#allocation5 + $0x10] sm:$0xff]
    %v52 = vld [vmem:[#allocation5 + $0x18] sm:$0xff]
    %v53 = vld [vmem:[#allocation5 + $0x20] sm:$0xff]
    %v54 = vld [vmem:[#allocation5 + $0x28] sm:$0xff]
    %v55 = vld [vmem:[#allocation5 + $0x30] sm:$0xff]
    %v56 = vld [vmem:[#allocation5 + $0x38] sm:$0xff]
    %v57 = vld [vmem:[#allocation5 + $0x40] sm:$0xff]
    %v58 = vld [vmem:[#allocation5 + $0x48] sm:$0xff]
    %v59 = vld [vmem:[#allocation5 + $0x50] sm:$0xff]
    %v60 = vld [vmem:[#allocation5 + $0x58] sm:$0xff]
    %v61 = vld [vmem:[#allocation5 + $0x60] sm:$0xff]
    %v62 = vld [vmem:[#allocation5 + $0x68] sm:$0xff]
    %v63 = vld [vmem:[#allocation5 + $0x70] sm:$0xff]
    %v64 = vld [vmem:[#allocation5 + $0x78] sm:$0xff]
    %v65 = vld [vmem:[#allocation5 + $0x80] sm:$0xff]
    %v66 = vld [vmem:[#allocation5 + $0x88] sm:$0xff]
    %v67 = vld [vmem:[#allocation5 + $0x90] sm:$0xff]
    %v68 = vld [vmem:[#allocation5 + $0x98] sm:$0xff]
    %v69 = vld [vmem:[#allocation5 + $0xa0] sm:$0xff]
    %v70 = vld [vmem:[#allocation5 + $0xa8] sm:$0xff]
    %v71 = vld [vmem:[#allocation5 + $0xb0] sm:$0xff]
    %v72 = vld [vmem:[#allocation5 + $0xb8] sm:$0xff]
    %v73 = vld [vmem:[#allocation5 + $0xc0] sm:$0xff]
    %v74 = vld [vmem:[#allocation5 + $0xc8] sm:$0xff]
    %v75 = vld [vmem:[#allocation5 + $0xd0] sm:$0xff]
    %v76 = vld [vmem:[#allocation5 + $0xd8] sm:$0xff]
    %v77 = vld [vmem:[#allocation5 + $0xe0] sm:$0xff]
    %v78 = vld [vmem:[#allocation5 + $0xe8] sm:$0xff]
    %v79 = vld [vmem:[#allocation5 + $0xf0] sm:$0xff]
    %v80 = vld [vmem:[#allocation5 + $0xf8] sm:$0xff]
    %v81 = vld [vmem:[#allocation5 + $0x100] sm:$0xff]
    %v82 = vld [vmem:[#allocation5 + $0x108] sm:$0xff]
    %v83 = vld [vmem:[#allocation5 + $0x110] sm:$0xff]
    %v84 = vld [vmem:[#allocation5 + $0x118] sm:$0xff]
    %v85 = vld [vmem:[#allocation5 + $0x120] sm:$0xff]
    %v86 = vld [vmem:[#allocation5 + $0x128] sm:$0xff]
    %v87 = vld [vmem:[#allocation5 + $0x130] sm:$0xff]
    %v88 = vld [vmem:[#allocation5 + $0x138] sm:$0xff]
    %v89 = vld [vmem:[#allocation5 + $0x140] sm:$0xff]
    %v90 = vld [vmem:[#allocation5 + $0x148] sm:$0xff]
    %v91 = vld [vmem:[#allocation5 + $0x150] sm:$0xff]
    %v92 = vld [vmem:[#allocation5 + $0x158] sm:$0xff]
    %v93 = vld [vmem:[#allocation5 + $0x160] sm:$0xff]
    %v94 = vld [vmem:[#allocation5 + $0x168] sm:$0xff]
    %v95 = vld [vmem:[#allocation5 + $0x170] sm:$0xff]
    %v96 = vld [vmem:[#allocation5 + $0x178] sm:$0xff]
    %v97 = vld [vmem:[#allocation5 + $0x180] sm:$0xff]
    %v98 = vld [vmem:[#allocation5 + $0x188] sm:$0xff]
    %v99 = vld [vmem:[#allocation5 + $0x190] sm:$0xff]
    %v100 = vld [vmem:[#allocation5 + $0x198] sm:$0xff]
    %v101 = vld [vmem:[#allocation5 + $0x1a0] sm:$0xff]
    %v102 = vld [vmem:[#allocation5 + $0x1a8] sm:$0xff]
    %v103 = vld [vmem:[#allocation5 + $0x1b0] sm:$0xff]
    %v104 = vld [vmem:[#allocation5 + $0x1b8] sm:$0xff]
    %v105 = vld [vmem:[#allocation5 + $0x1c0] sm:$0xff]
    %v106 = vld [vmem:[#allocation5 + $0x1c8] sm:$0xff]
    %v107 = vld [vmem:[#allocation5 + $0x1d0] sm:$0xff]
    %v108 = vld [vmem:[#allocation5 + $0x1d8] sm:$0xff]
    %v109 = vld [vmem:[#allocation5 + $0x1e0] sm:$0xff]
    %v110 = vld [vmem:[#allocation5 + $0x1e8] sm:$0xff]
    %v111 = vld [vmem:[#allocation5 + $0x1f0] sm:$0xff]
    %v112 = vld [vmem:[#allocation5 + $0x1f8] sm:$0xff]
    %v113 = vld [vmem:[#allocation5 + $0x200] sm:$0xff]
    %v114 = vld [vmem:[#allocation5 + $0x208] sm:$0xff]
    %v115 = vld [vmem:[#allocation5 + $0x210] sm:$0xff]
    %v116 = vld [vmem:[#allocation5 + $0x218] sm:$0xff]
    %v117 = vld [vmem:[#allocation5 + $0x220] sm:$0xff]
    %v118 = vld [vmem:[#allocation5 + $0x228] sm:$0xff]
    %v119 = vld [vmem:[#allocation5 + $0x230] sm:$0xff]
    %v120 = vld [vmem:[#allocation5 + $0x238] sm:$0xff]
    %v121 = vld [vmem:[#allocation5 + $0x240] sm:$0xff]
    %v122 = vld [vmem:[#allocation5 + $0x248] sm:$0xff]
    %v123 = vld [vmem:[#allocation5 + $0x250] sm:$0xff]
    %v124 = vld [vmem:[#allocation5 + $0x258] sm:$0xff]
    %v125 = vld [vmem:[#allocation5 + $0x260] sm:$0xff]
    %v126 = vld [vmem:[#allocation5 + $0x268] sm:$0xff]
    %v127 = vld [vmem:[#allocation5 + $0x270] sm:$0xff]
    %v128 = vld [vmem:[#allocation5 + $0x278] sm:$0xff]
    %v129 = vld [vmem:[#allocation5 + $0x280] sm:$0xff]
    %v130 = vld [vmem:[#allocation5 + $0x288] sm:$0xff]
    %v131 = vld [vmem:[#allocation5 + $0x290] sm:$0xff]
    %v132 = vld [vmem:[#allocation5 + $0x298] sm:$0xff]
    %v133 = vld [vmem:[#allocation5 + $0x2a0] sm:$0xff]
    %v134 = vld [vmem:[#allocation5 + $0x2a8] sm:$0xff]
    %v135 = vld [vmem:[#allocation5 + $0x2b0] sm:$0xff]
    %v136 = vld [vmem:[#allocation5 + $0x2b8] sm:$0xff]
    %v137 = vld [vmem:[#allocation5 + $0x2c0] sm:$0xff]
    %v138 = vld [vmem:[#allocation5 + $0x2c8] sm:$0xff]
    %v139 = vld [vmem:[#allocation5 + $0x2d0] sm:$0xff]
    %v140 = vld [vmem:[#allocation5 + $0x2d8] sm:$0xff]
    %v141 = vld [vmem:[#allocation5 + $0x2e0] sm:$0xff]
    %v142 = vld [vmem:[#allocation5 + $0x2e8] sm:$0xff]
    %v143 = vld [vmem:[#allocation5 + $0x2f0] sm:$0xff]
    %v144 = vld [vmem:[#allocation5 + $0x2f8] sm:$0xff]
    %v145 = vld [vmem:[#allocation5 + $0x300] sm:$0xff]
    %v146 = vld [vmem:[#allocation5 + $0x308] sm:$0xff]
    %v147 = vld [vmem:[#allocation5 + $0x310] sm:$0xff]
    %v148 = vld [vmem:[#allocation5 + $0x318] sm:$0xff]
    %v149 = vld [vmem:[#allocation5 + $0x320] sm:$0xff]
    %v150 = vld [vmem:[#allocation5 + $0x328] sm:$0xff]
    %v151 = vld [vmem:[#allocation5 + $0x330] sm:$0xff]
    %v152 = vld [vmem:[#allocation5 + $0x338] sm:$0xff]
    %v153 = vld [vmem:[#allocation5 + $0x340] sm:$0xff]
    %v154 = vld [vmem:[#allocation5 + $0x348] sm:$0xff]
    %v155 = vld [vmem:[#allocation5 + $0x350] sm:$0xff]
    %v156 = vld [vmem:[#allocation5 + $0x358] sm:$0xff]
    %v157 = vld [vmem:[#allocation5 + $0x360] sm:$0xff]
    %v158 = vld [vmem:[#allocation5 + $0x368] sm:$0xff]
    %v159 = vld [vmem:[#allocation5 + $0x370] sm:$0xff]
    %v160 = vld [vmem:[#allocation5 + $0x378] sm:$0xff]
    %v161 = vld [vmem:[#allocation5 + $0x380] sm:$0xff]
    %v162 = vld [vmem:[#allocation5 + $0x388] sm:$0xff]
    %v163 = vld [vmem:[#allocation5 + $0x390] sm:$0xff]
    %v164 = vld [vmem:[#allocation5 + $0x398] sm:$0xff]
    %v165 = vld [vmem:[#allocation5 + $0x3a0] sm:$0xff]
    %v166 = vld [vmem:[#allocation5 + $0x3a8] sm:$0xff]
    %v167 = vld [vmem:[#allocation5 + $0x3b0] sm:$0xff]
    %v168 = vld [vmem:[#allocation5 + $0x3b8] sm:$0xff]
    %v169 = vld [vmem:[#allocation5 + $0x3c0] sm:$0xff]
    %v170 = vld [vmem:[#allocation5 + $0x3c8] sm:$0xff]
    %v171 = vld [vmem:[#allocation5 + $0x3d0] sm:$0xff]
    %v172 = vld [vmem:[#allocation5 + $0x3d8] sm:$0xff]
    %v173 = vld [vmem:[#allocation5 + $0x3e0] sm:$0xff]
    %v174 = vld [vmem:[#allocation5 + $0x3e8] sm:$0xff]
    %v175 = vld [vmem:[#allocation5 + $0x3f0] sm:$0x3]
    %v176 = vld [vmem:[%s2] sm:$0x1]
    %v178 = vlaneseq
    %v179 = vshrl.u32 %v178, 7
    %v180 = vsub.s32 0, %v179
    %v181 = vrot.slane %v176, %v180
    %vm183 = vcmask 932864
    %v185 = vsel %vm183, %v48, 0
    %vm187 = vcmask 1041408
    %v189 = vsel %vm187, %v175, 0
    %191 = vmatprep.subr.mxu0 0.0
    %192 = vmatpush1.msra.mxu0 %v64
    %193 = vmatprep.subr.mxu0 0.0
    %194 = vmatpush1.msra.mxu0 %v63
    %195 = vmatprep.subr.mxu0 0.0
    %196 = vmatpush1.msra.mxu0 %v62
    %197 = vmatprep.subr.mxu0 0.0
    %198 = vmatpush1.msra.mxu0 %v61
    %199 = vmatprep.subr.mxu0 0.0
    %200 = vmatpush1.msra.mxu0 %v60
    %201 = vmatprep.subr.mxu0 0.0
    %202 = vmatpush1.msra.mxu0 %v59
    %203 = vmatprep.subr.mxu0 0.0
    %204 = vmatpush1.msra.mxu0 %v58
    %205 = vmatprep.subr.mxu0 0.0
    %206 = vmatpush1.msra.mxu0 %v57
    %207 = vmatprep.subr.mxu0 0.0
    %208 = vmatpush1.msra.mxu0 %v56
    %209 = vmatprep.subr.mxu0 0.0
    %210 = vmatpush1.msra.mxu0 %v55
    %211 = vmatprep.subr.mxu0 0.0
    %212 = vmatpush1.msra.mxu0 %v54
    %213 = vmatprep.subr.mxu0 0.0
    %214 = vmatpush1.msra.mxu0 %v53
    %215 = vmatprep.subr.mxu0 0.0
    %216 = vmatpush1.msra.mxu0 %v52
    %217 = vmatprep.subr.mxu0 0.0
    %218 = vmatpush1.msra.mxu0 %v51
    %219 = vmatprep.subr.mxu0 0.0
    %220 = vmatpush1.msra.mxu0 %v50
    %221 = vmatprep.subr.mxu0 0.0
    %222 = vmatpush1.msra.mxu0 %v49
    %223 = vmatprep.subr.mxu0 0.0
    %224 = vmatpush2.msra.mxu0 %v80
    %225 = vmatprep.subr.mxu0 0.0
    %226 = vmatpush2.msra.mxu0 %v79
    %227 = vmatprep.subr.mxu0 0.0
    %228 = vmatpush2.msra.mxu0 %v78
    %229 = vmatprep.subr.mxu0 0.0
    %230 = vmatpush2.msra.mxu0 %v77
    %231 = vmatprep.subr.mxu0 0.0
    %232 = vmatpush2.msra.mxu0 %v76
    %233 = vmatprep.subr.mxu0 0.0
    %234 = vmatpush2.msra.mxu0 %v75
    %235 = vmatprep.subr.mxu0 0.0
    %236 = vmatpush2.msra.mxu0 %v74
    %237 = vmatprep.subr.mxu0 0.0
    %238 = vmatpush2.msra.mxu0 %v73
    %239 = vmatprep.subr.mxu0 0.0
    %240 = vmatpush2.msra.mxu0 %v72
    %241 = vmatprep.subr.mxu0 0.0
    %242 = vmatpush2.msra.mxu0 %v71
    %243 = vmatprep.subr.mxu0 0.0
    %244 = vmatpush2.msra.mxu0 %v70
    %245 = vmatprep.subr.mxu0 0.0
    %246 = vmatpush2.msra.mxu0 %v69
    %247 = vmatprep.subr.mxu0 0.0
    %248 = vmatpush2.msra.mxu0 %v68
    %249 = vmatprep.subr.mxu0 0.0
    %250 = vmatpush2.msra.mxu0 %v67
    %251 = vmatprep.subr.mxu0 0.0
    %252 = vmatpush2.msra.mxu0 %v66
    %253 = vmatprep.subr.mxu0 0.0
    %254 = vmatpush2.msra.mxu0 %v65
    %255 = vmatprep.mubr.f32.mxu0 %v42
    %256 = vmatmul.mubr.f32.gmra.mxu0 %v41
    %v257 = vpop.f32.mrf.mxu0
    %v258 = vadd.f32 %v181, %v257
    %v259 = vpop.f32.mrf.mxu0
    %260 = vdwg.mxu0
    %261 = vmatprep.subr.mxu0 0.0
    %262 = vmatpush1.msra.mxu0 %v96
    %263 = vmatprep.subr.mxu0 0.0
    %264 = vmatpush1.msra.mxu0 %v95
    %265 = vmatprep.subr.mxu0 0.0
    %266 = vmatpush1.msra.mxu0 %v94
    %267 = vmatprep.subr.mxu0 0.0
    %268 = vmatpush1.msra.mxu0 %v93
    %269 = vmatprep.subr.mxu0 0.0
    %270 = vmatpush1.msra.mxu0 %v92
    %271 = vmatprep.subr.mxu0 0.0
    %272 = vmatpush1.msra.mxu0 %v91
    %273 = vmatprep.subr.mxu0 0.0
    %274 = vmatpush1.msra.mxu0 %v90
    %275 = vmatprep.subr.mxu0 0.0
    %276 = vmatpush1.msra.mxu0 %v89
    %277 = vmatprep.subr.mxu0 0.0
    %278 = vmatpush1.msra.mxu0 %v88
    %279 = vmatprep.subr.mxu0 0.0
    %280 = vmatpush1.msra.mxu0 %v87
    %281 = vmatprep.subr.mxu0 0.0
    %282 = vmatpush1.msra.mxu0 %v86
    %283 = vmatprep.subr.mxu0 0.0
    %284 = vmatpush1.msra.mxu0 %v85
    %285 = vmatprep.subr.mxu0 0.0
    %286 = vmatpush1.msra.mxu0 %v84
    %287 = vmatprep.subr.mxu0 0.0
    %288 = vmatpush1.msra.mxu0 %v83
    %289 = vmatprep.subr.mxu0 0.0
    %290 = vmatpush1.msra.mxu0 %v82
    %291 = vmatprep.subr.mxu0 0.0
    %292 = vmatpush1.msra.mxu0 %v81
    %293 = vmatprep.subr.mxu0 0.0
    %294 = vmatpush2.msra.mxu0 %v112
    %295 = vmatprep.subr.mxu0 0.0
    %296 = vmatpush2.msra.mxu0 %v111
    %297 = vmatprep.subr.mxu0 0.0
    %298 = vmatpush2.msra.mxu0 %v110
    %299 = vmatprep.subr.mxu0 0.0
    %300 = vmatpush2.msra.mxu0 %v109
    %301 = vmatprep.subr.mxu0 0.0
    %302 = vmatpush2.msra.mxu0 %v108
    %303 = vmatprep.subr.mxu0 0.0
    %304 = vmatpush2.msra.mxu0 %v107
    %305 = vmatprep.subr.mxu0 0.0
    %306 = vmatpush2.msra.mxu0 %v106
    %307 = vmatprep.subr.mxu0 0.0
    %308 = vmatpush2.msra.mxu0 %v105
    %309 = vmatprep.subr.mxu0 0.0
    %310 = vmatpush2.msra.mxu0 %v104
    %311 = vmatprep.subr.mxu0 0.0
    %312 = vmatpush2.msra.mxu0 %v103
    %313 = vmatprep.subr.mxu0 0.0
    %314 = vmatpush2.msra.mxu0 %v102
    %315 = vmatprep.subr.mxu0 0.0
    %316 = vmatpush2.msra.mxu0 %v101
    %317 = vmatprep.subr.mxu0 0.0
    %318 = vmatpush2.msra.mxu0 %v100
    %319 = vmatprep.subr.mxu0 0.0
    %320 = vmatpush2.msra.mxu0 %v99
    %321 = vmatprep.subr.mxu0 0.0
    %322 = vmatpush2.msra.mxu0 %v98
    %323 = vmatprep.subr.mxu0 0.0
    %324 = vmatpush2.msra.mxu0 %v97
    %325 = vmatprep.mubr.f32.mxu0 %v44
    %326 = vmatmul.mubr.f32.gmra.mxu0 %v43
    %v327 = vpop.f32.mrf.mxu0
    %v328 = vadd.f32 %v258, %v327
    %v329 = vpop.f32.mrf.mxu0
    %330 = vdwg.mxu0
    %331 = vmatprep.subr.mxu0 0.0
    %332 = vmatpush1.msra.mxu0 %v128
    %333 = vmatprep.subr.mxu0 0.0
    %334 = vmatpush1.msra.mxu0 %v127
    %335 = vmatprep.subr.mxu0 0.0
    %336 = vmatpush1.msra.mxu0 %v126
    %337 = vmatprep.subr.mxu0 0.0
    %338 = vmatpush1.msra.mxu0 %v125
    %339 = vmatprep.subr.mxu0 0.0
    %340 = vmatpush1.msra.mxu0 %v124
    %341 = vmatprep.subr.mxu0 0.0
    %342 = vmatpush1.msra.mxu0 %v123
    %343 = vmatprep.subr.mxu0 0.0
    %344 = vmatpush1.msra.mxu0 %v122
    %345 = vmatprep.subr.mxu0 0.0
    %346 = vmatpush1.msra.mxu0 %v121
    %347 = vmatprep.subr.mxu0 0.0
    %348 = vmatpush1.msra.mxu0 %v120
    %349 = vmatprep.subr.mxu0 0.0
    %350 = vmatpush1.msra.mxu0 %v119
    %351 = vmatprep.subr.mxu0 0.0
    %352 = vmatpush1.msra.mxu0 %v118
    %353 = vmatprep.subr.mxu0 0.0
    %354 = vmatpush1.msra.mxu0 %v117
    %355 = vmatprep.subr.mxu0 0.0
    %356 = vmatpush1.msra.mxu0 %v116
    %357 = vmatprep.subr.mxu0 0.0
    %358 = vmatpush1.msra.mxu0 %v115
    %359 = vmatprep.subr.mxu0 0.0
    %360 = vmatpush1.msra.mxu0 %v114
    %361 = vmatprep.subr.mxu0 0.0
    %362 = vmatpush1.msra.mxu0 %v113
    %363 = vmatprep.subr.mxu0 0.0
    %364 = vmatpush2.msra.mxu0 %v144
    %365 = vmatprep.subr.mxu0 0.0
    %366 = vmatpush2.msra.mxu0 %v143
    %367 = vmatprep.subr.mxu0 0.0
    %368 = vmatpush2.msra.mxu0 %v142
    %369 = vmatprep.subr.mxu0 0.0
    %370 = vmatpush2.msra.mxu0 %v141
    %371 = vmatprep.subr.mxu0 0.0
    %372 = vmatpush2.msra.mxu0 %v140
    %373 = vmatprep.subr.mxu0 0.0
    %374 = vmatpush2.msra.mxu0 %v139
    %375 = vmatprep.subr.mxu0 0.0
    %376 = vmatpush2.msra.mxu0 %v138
    %377 = vmatprep.subr.mxu0 0.0
    %378 = vmatpush2.msra.mxu0 %v137
    %379 = vmatprep.subr.mxu0 0.0
    %380 = vmatpush2.msra.mxu0 %v136
    %381 = vmatprep.subr.mxu0 0.0
    %382 = vmatpush2.msra.mxu0 %v135
    %383 = vmatprep.subr.mxu0 0.0
    %384 = vmatpush2.msra.mxu0 %v134
    %385 = vmatprep.subr.mxu0 0.0
    %386 = vmatpush2.msra.mxu0 %v133
    %387 = vmatprep.subr.mxu0 0.0
    %388 = vmatpush2.msra.mxu0 %v132
    %389 = vmatprep.subr.mxu0 0.0
    %390 = vmatpush2.msra.mxu0 %v131
    %391 = vmatprep.subr.mxu0 0.0
    %392 = vmatpush2.msra.mxu0 %v130
    %393 = vmatprep.subr.mxu0 0.0
    %394 = vmatpush2.msra.mxu0 %v129
    %395 = vmatprep.mubr.f32.mxu0 %v46
    %396 = vmatmul.mubr.f32.gmra.mxu0 %v45
    %v397 = vpop.f32.mrf.mxu0
    %v398 = vadd.f32 %v328, %v397
    %v399 = vpop.f32.mrf.mxu0
    %400 = vdwg.mxu0
    %401 = vmatprep.subr.mxu0 0.0
    %402 = vmatpush1.msra.mxu0 %v160
    %403 = vmatprep.subr.mxu0 0.0
    %404 = vmatpush1.msra.mxu0 %v159
    %405 = vmatprep.subr.mxu0 0.0
    %406 = vmatpush1.msra.mxu0 %v158
    %407 = vmatprep.subr.mxu0 0.0
    %408 = vmatpush1.msra.mxu0 %v157
    %409 = vmatprep.subr.mxu0 0.0
    %410 = vmatpush1.msra.mxu0 %v156
    %411 = vmatprep.subr.mxu0 0.0
    %412 = vmatpush1.msra.mxu0 %v155
    %413 = vmatprep.subr.mxu0 0.0
    %414 = vmatpush1.msra.mxu0 %v154
    %415 = vmatprep.subr.mxu0 0.0
    %416 = vmatpush1.msra.mxu0 %v153
    %417 = vmatprep.subr.mxu0 0.0
    %418 = vmatpush1.msra.mxu0 %v152
    %419 = vmatprep.subr.mxu0 0.0
    %420 = vmatpush1.msra.mxu0 %v151
    %421 = vmatprep.subr.mxu0 0.0
    %422 = vmatpush1.msra.mxu0 %v150
    %423 = vmatprep.subr.mxu0 0.0
    %424 = vmatpush1.msra.mxu0 %v149
    %425 = vmatprep.subr.mxu0 0.0
    %426 = vmatpush1.msra.mxu0 %v148
    %427 = vmatprep.subr.mxu0 0.0
    %428 = vmatpush1.msra.mxu0 %v147
    %429 = vmatprep.subr.mxu0 0.0
    %430 = vmatpush1.msra.mxu0 %v146
    %431 = vmatprep.subr.mxu0 0.0
    %432 = vmatpush1.msra.mxu0 %v145
    %433 = vmatprep.subr.mxu0 0.0
    %434 = vmatpush2.msra.mxu0 0.0
    %435 = vmatprep.subr.mxu0 0.0
    %436 = vmatpush2.msra.mxu0 %v189
    %437 = vmatprep.subr.mxu0 0.0
    %438 = vmatpush2.msra.mxu0 %v174
    %439 = vmatprep.subr.mxu0 0.0
    %440 = vmatpush2.msra.mxu0 %v173
    %441 = vmatprep.subr.mxu0 0.0
    %442 = vmatpush2.msra.mxu0 %v172
    %443 = vmatprep.subr.mxu0 0.0
    %444 = vmatpush2.msra.mxu0 %v171
    %445 = vmatprep.subr.mxu0 0.0
    %446 = vmatpush2.msra.mxu0 %v170
    %447 = vmatprep.subr.mxu0 0.0
    %448 = vmatpush2.msra.mxu0 %v169
    %449 = vmatprep.subr.mxu0 0.0
    %450 = vmatpush2.msra.mxu0 %v168
    %451 = vmatprep.subr.mxu0 0.0
    %452 = vmatpush2.msra.mxu0 %v167
    %453 = vmatprep.subr.mxu0 0.0
    %454 = vmatpush2.msra.mxu0 %v166
    %455 = vmatprep.subr.mxu0 0.0
    %456 = vmatpush2.msra.mxu0 %v165
    %457 = vmatprep.subr.mxu0 0.0
    %458 = vmatpush2.msra.mxu0 %v164
    %459 = vmatprep.subr.mxu0 0.0
    %460 = vmatpush2.msra.mxu0 %v163
    %461 = vmatprep.subr.mxu0 0.0
    %462 = vmatpush2.msra.mxu0 %v162
    %463 = vmatprep.subr.mxu0 0.0
    %464 = vmatpush2.msra.mxu0 %v161
    %465 = vmatprep.mubr.f32.mxu0 %v185
    %466 = vmatmul.mubr.f32.gmra.mxu0 %v47
    %v467 = vpop.f32.mrf.mxu0
    %v468 = vadd.f32 %v398, %v467
    %v469 = vpop.f32.mrf.mxu0
    %470 = vdwg.mxu0
    %471 = vst [vmem:[#allocation7] sm:$0xff] %v468
    // Predicated region
    $region22: #{tpu_custom_call.1} parent=1 // pred_check
      _
    $region23: #{tpu_custom_call.1} parent=1 // pred_check_branch
      %473 = sbr.rel (0) target = $region25
    $region24: #{tpu_custom_call.1} parent=1 // pred_region
      %s475 = ssub.s32 128, 128
      %476 = vsyncadd [#allocation4], %s475
      %s478 = sshll.u32 [#allocation7], 4
      %s479 = int_to_ptr.vmem [resolvable:$true] %s478
      %481 = dma.vmem_to_hbm [thread:$0]  %s479, 128, %s3, [#allocation4]
    $region25: #{tpu_custom_call.1} parent=1 // pred_fallthru
      _
    // Predicated region
    $region26: #{tpu_custom_call.1} parent=1 // pred_check
      _
    $region27: #{tpu_custom_call.1} parent=1 // pred_check_branch
      %483 = sbr.rel (0) target = $region29
    $region28: #{tpu_custom_call.1} parent=1 // pred_region
      %484 = dma.done [#allocation4], 128
    $region29: #{tpu_custom_call.1} parent=1 // pred_fallthru
      _
    %485 = vsyncpa [#allocation3], 1
    %486 = vsyncpa [#allocation6], 1
    %487 = vsyncpa [#allocation4], 1

</llo_original>
